<compile_context>
chip_gen: v7x
topology: tpu7x:2x2x1
jax: 0.10.0
libtpu: 0.0.40
codegen_flags: <defaults>
</compile_context>

<pallas_src>
import functools
import math

import jax
import jax.numpy as jnp
import numpy as np
from jax.experimental import pallas as pl
from jax.experimental.pallas import tpu as pltpu

MARGIN = 0.5
S = 64.0
COS_M = math.cos(MARGIN)
SIN_M = math.sin(MARGIN)
THRESHOLD = math.cos(math.pi - MARGIN)
MM = math.sin(math.pi - MARGIN) * MARGIN
EMA = 0.01


# --------------------------------------------------------------------------
# Generation-aware tile / VMEM selection
# --------------------------------------------------------------------------
def _device_caps():
    """Returns (tile_b_cap, tile_c_cap, vmem_limit_bytes, fused_max_bytes)."""
    try:
        kind = jax.devices()[0].device_kind.lower()
    except Exception:  # pragma: no cover - defensive
        kind = ""
    if ("v5" in kind) or ("v6" in kind):
        # 128 MiB physical VMEM, HBM-bound: bigger blocks (~4 MiB) amortize
        # the per-step overhead; raise the scoped VMEM limit so the
        # double-buffered pass-2 blocks fit (esp. v5e's 16 MiB default).
        return 256, 4096, 64 << 20, 8 << 20
    # v7x (64 MiB physical VMEM, VALU-bound) or unknown generation:
    # conservative 2 MiB blocks, default scoped VMEM.
    return 256, 2048, None, 4 << 20


def _auto_tile_b(batch, cap):
    if batch <= 8:
        return batch
    if batch <= cap:
        # Split the batch into two row blocks (when it stays remainder-free
        # and a multiple of 8) so pass 1's "parallel" axis can be sharded
        # across TensorCores on v7x instead of leaving one core idle.
        if batch % 16 == 0:
            return batch // 2
        return batch
    # batch > cap: largest multiple of 8 <= cap that divides batch
    # (remainder-free => the mask-free specialized kernel body is used).
    t = (cap // 8) * 8
    while t >= 8:
        if batch % t == 0:
            return t
        t -= 8
    return (cap // 8) * 8


def _auto_tile_c(classes, cap):
    if classes <= cap:
        return classes
    # Largest lane-aligned divisor of C <= cap so no column remainder exists.
    t = (cap // 128) * 128
    while t >= 128:
        if classes % t == 0:
            return t
        t -= 128
    return (cap // 128) * 128


def _compiler_params(dim_sems=None, vmem_limit=None):
    kwargs = {}
    if dim_sems is not None:
        kwargs["dimension_semantics"] = dim_sems
    if vmem_limit is not None:
        kwargs["vmem_limit_bytes"] = vmem_limit
    return pltpu.CompilerParams(**kwargs) if kwargs else None


# --------------------------------------------------------------------------
# Fused single-block kernel (small problems: logits read from HBM once)
# --------------------------------------------------------------------------
def _fused_kernel(t_ref, logits_ref, labels_ref, out_ref, tnew_ref, *, classes):
    cos = jnp.clip(logits_ref[...].astype(jnp.float32), -1.0, 1.0)
    labels = labels_ref[...]                                   # (B, 1) i32
    valid = labels != -1                                       # (B, 1)

    col = jax.lax.broadcasted_iota(jnp.int32, cos.shape, 1)
    is_target = col == labels                                  # (B, C)

    # Row statistics (validity masked on the (B,1) partials, not the tile).
    row_sum = jnp.sum(cos, axis=1, keepdims=True)              # (B, 1)
    row_sum = jnp.where(valid, row_sum, 0.0)
    target_logit = jnp.sum(jnp.where(is_target, cos, 0.0),
                           axis=1, keepdims=True)              # (B, 1)

    nvalid = jnp.sum(valid.astype(jnp.float32), axis=0, keepdims=True)  # (1,1)
    total = jnp.sum(row_sum, axis=0, keepdims=True)                     # (1,1)
    chunk_mean = total / (jnp.maximum(nvalid, 1.0) * float(classes))
    t_new = chunk_mean * EMA + (1.0 - EMA) * t_ref[0, 0]                # (1,1)
    tnew_ref[...] = t_new

    sin_theta = jnp.sqrt(jnp.maximum(1.0 - target_logit * target_logit, 0.0))
    cos_theta_m = target_logit * COS_M - sin_theta * SIN_M
    final_target = jnp.where(target_logit > THRESHOLD,
                             cos_theta_m, target_logit - MM)            # (B,1)

    # Validity folded into the threshold: one (B,1) op instead of a
    # full-tile AND.
    thr = jnp.where(valid, cos_theta_m, jnp.inf)
    hard = cos > thr
    out = jnp.where(hard, cos * (t_new + cos), cos)
    out = jnp.where(is_target, final_target, out)
    out_ref[...] = (out * S).astype(out_ref.dtype)


# --------------------------------------------------------------------------
# Pass 1: per-row reductions over the class axis
# --------------------------------------------------------------------------
def _row_stats_kernel(logits_ref, labels_ref, rowsum_ref, tlogit_ref,
                      *, batch, classes, tile_b, tile_c, mask_rows, mask_cols):
    i = pl.program_id(0)
    j = pl.program_id(1)

    @pl.when(j == 0)
    def _():
        rowsum_ref[...] = jnp.zeros_like(rowsum_ref)
        tlogit_ref[...] = jnp.zeros_like(tlogit_ref)

    cos = jnp.clip(logits_ref[...].astype(jnp.float32), -1.0, 1.0)
    labels = labels_ref[...]                                   # (tb, 1) i32
    col = jax.lax.broadcasted_iota(jnp.int32, cos.shape, 1) + j * tile_c

    # Column-remainder masking is only emitted when a remainder exists
    # (trace-time specialization: interior/all tiles run a mask-free body).
    if mask_cols:
        contrib = jnp.where(col < classes, cos, 0.0)
    else:
        contrib = cos
    row_sum = jnp.sum(contrib, axis=1, keepdims=True)          # (tb, 1)

    # col >= classes never equals a (valid, < classes) label, so no column
    # mask is needed here; garbage from OOB columns is never selected.
    is_target = col == labels
    tgt_sum = jnp.sum(jnp.where(is_target, cos, 0.0), axis=1, keepdims=True)

    # Row validity applied AFTER the lane reduction on (tb,1) partials.
    row_ok = labels != -1
    if mask_rows:
        row = jax.lax.broadcasted_iota(jnp.int32, labels.shape, 0) + i * tile_b
        row_ok = row_ok & (row < batch)

    rowsum_ref[...] += jnp.where(row_ok, row_sum, 0.0)
    tlogit_ref[...] += jnp.where(row_ok, tgt_sum, 0.0)


# --------------------------------------------------------------------------
# Pass 2: purely elementwise CurricularFace update on one (tb, tc) tile
# --------------------------------------------------------------------------
def _update_kernel(t_ref, logits_ref, labels_ref, tlogit_ref, out_ref,
                   *, tile_c):
    j = pl.program_id(1)

    cos = jnp.clip(logits_ref[...].astype(jnp.float32), -1.0, 1.0)
    labels = labels_ref[...]                                   # (tb, 1)
    valid = labels != -1
    target_logit = tlogit_ref[...]                             # (tb, 1) f32

    sin_theta = jnp.sqrt(jnp.maximum(1.0 - target_logit * target_logit, 0.0))
    cos_theta_m = target_logit * COS_M - sin_theta * SIN_M
    final_target = jnp.where(target_logit > THRESHOLD,
                             cos_theta_m, target_logit - MM)   # (tb, 1)

    t_new = t_ref[0, 0]                                        # SMEM scalar

    col = jax.lax.broadcasted_iota(jnp.int32, cos.shape, 1) + j * tile_c
    is_target = col == labels                                  # (tb, tc)

    # Validity folded into the threshold ((tb,1) op) instead of a full-tile
    # AND: invalid rows get +inf and never produce hard examples.
    thr = jnp.where(valid, cos_theta_m, jnp.inf)
    hard = cos > thr
    out = jnp.where(hard, cos * (t_new + cos), cos)
    out = jnp.where(is_target, final_target, out)

    out_ref[...] = (out * S).astype(out_ref.dtype)
    # TODO(synk): on v7x, if xprof still shows pass-2 VALU saturation, move
    # the target-column overwrite to a tiny post-kernel scatter instead.


# --------------------------------------------------------------------------
# Wrapper
# --------------------------------------------------------------------------
def _curricular_face(logits, labels, t, *, tile_b=None, tile_c=None,
                     fused=None, out_dtype=None):
    """logits: (B, C) f32/bf16, labels: (B,) i32 (-1 = ignore), t: scalar f32.

    Returns (output, None, t_new) matching the PyTorch forward (output, None)
    plus the updated EMA buffer value as an explicit scalar output."""
    B, C = logits.shape
    out_dtype = logits.dtype if out_dtype is None else out_dtype
    cap_b, cap_c, vmem_limit, fused_max = _device_caps()

    labels2d = labels.reshape(B, 1).astype(jnp.int32)
    t_smem = jnp.reshape(jnp.asarray(t, jnp.float32), (1, 1))

    if fused is None:
        fused = (B * C * 4) <= fused_max

    # ---- small-problem fast path: single kernel, logits read once ----------
    if fused:
        out, t_new2d = pl.pallas_call(
            functools.partial(_fused_kernel, classes=C),
            out_shape=(jax.ShapeDtypeStruct((B, C), out_dtype),
                       jax.ShapeDtypeStruct((1, 1), jnp.float32)),
            in_specs=[
                pl.BlockSpec(memory_space=pltpu.MemorySpace.SMEM),   # t
                pl.BlockSpec(memory_space=pltpu.MemorySpace.VMEM),   # logits
                pl.BlockSpec(memory_space=pltpu.MemorySpace.VMEM),   # labels
            ],
            out_specs=(pl.BlockSpec(memory_space=pltpu.MemorySpace.VMEM),
                       pl.BlockSpec(memory_space=pltpu.MemorySpace.VMEM)),
            compiler_params=_compiler_params(None, vmem_limit),
        )(t_smem, logits, labels2d)
        return out, None, t_new2d[0, 0]

    # ---- general two-pass path ---------------------------------------------
    if tile_b is None:
        tile_b = _auto_tile_b(B, cap_b)
    if tile_c is None:
        tile_c = _auto_tile_c(C, cap_c)

    nb = pl.cdiv(B, tile_b)
    nc = pl.cdiv(C, tile_c)
    mask_rows = (B % tile_b) != 0
    mask_cols = (C % tile_c) != 0

    logits_spec = pl.BlockSpec((tile_b, tile_c), lambda i, j: (i, j))
    rowvec_spec = pl.BlockSpec((tile_b, 1), lambda i, j: (i, 0))

    # pass 1: per-row reductions (C axis is the reduction -> "arbitrary")
    row_sums, target_logits = pl.pallas_call(
        functools.partial(_row_stats_kernel, batch=B, classes=C,
                          tile_b=tile_b, tile_c=tile_c,
                          mask_rows=mask_rows, mask_cols=mask_cols),
        out_shape=(jax.ShapeDtypeStruct((B, 1), jnp.float32),
                   jax.ShapeDtypeStruct((B, 1), jnp.float32)),
        grid=(nb, nc),
        in_specs=[logits_spec, rowvec_spec],
        out_specs=(rowvec_spec, rowvec_spec),
        compiler_params=_compiler_params(("parallel", "arbitrary"), vmem_limit),
    )(logits, labels2d)

    # tiny XLA glue: global mean over valid rows -> EMA update of t
    num_valid = jnp.sum(labels2d != -1).astype(jnp.float32)
    chunk_sum = jnp.sum(row_sums)
    # guard num_valid == 0 (all rows ignored): t decays instead of going NaN.
    chunk_mean = chunk_sum / (jnp.maximum(num_valid, 1.0) * float(C))
    t_new = chunk_mean * EMA + (1.0 - EMA) * jnp.asarray(t, dtype=jnp.float32)
    t_smem = jnp.reshape(t_new, (1, 1))

    # pass 2: elementwise update, fully parallel grid
    out = pl.pallas_call(
        functools.partial(_update_kernel, tile_c=tile_c),
        out_shape=jax.ShapeDtypeStruct((B, C), out_dtype),
        grid=(nb, nc),
        in_specs=[
            pl.BlockSpec(memory_space=pltpu.MemorySpace.SMEM),  # t_new (1,1)
            logits_spec,
            rowvec_spec,                                        # labels
            rowvec_spec,                                        # target logits
        ],
        out_specs=logits_spec,
        compiler_params=_compiler_params(("parallel", "parallel"), vmem_limit),
    )(t_smem, logits, labels2d, target_logits)

    return out, None, t_new


curricular_face = jax.jit(
    _curricular_face, static_argnames=("tile_b", "tile_c", "fused", "out_dtype"))


# --------------------------------------------------------------------------
# NumPy reference (independent re-implementation of the PyTorch forward)
# --------------------------------------------------------------------------
def _reference(logits, labels, t):
    cos_theta = np.clip(np.asarray(logits, dtype=np.float32), -1.0, 1.0)
    labels = np.asarray(labels)
    index = np.where(labels != -1)[0]
    target_chunk = cos_theta[index, :].copy()
    target_logit = cos_theta[index, labels[index]]
    sin_theta = np.sqrt(1.0 - target_logit ** 2)
    cos_theta_m = target_logit * COS_M - sin_theta * SIN_M
    mask = target_chunk > cos_theta_m[:, None]
    final_target_logit = np.where(
        target_logit > THRESHOLD, cos_theta_m, target_logit - MM)
    t_new = target_chunk.mean() * EMA + (1.0 - EMA) * float(t)
    hard = target_chunk[mask]
    target_chunk[mask] = hard * (t_new + hard)
    cos_theta[index, :] = target_chunk
    cos_theta[index, labels[index]] = final_target_logit
    return cos_theta * S, t_new


if __name__ == "__main__":
    key = jax.random.PRNGKey(0)
    k1, k2, k3, k4, k5, k6 = jax.random.split(key, 6)

    # --- case 1: small aligned shapes, auto dispatch -> fused fast path -----
    B1, C1 = 16, 256
    logits1 = jax.random.normal(k1, (B1, C1), dtype=jnp.float32) * 0.7
    labels1 = jax.random.randint(k2, (B1,), 0, C1, dtype=jnp.int32)
    labels1 = labels1.at[2].set(-1).at[5].set(-1)
    t0 = jnp.zeros((), dtype=jnp.float32)   # register_buffer('t', torch.zeros(1))

    out1, none_val, t1 = curricular_face(logits1, labels1, t0)
    out1 = jax.block_until_ready(out1)
    ref_out1, ref_t1 = _reference(np.asarray(logits1), np.asarray(labels1), 0.0)
    np.testing.assert_allclose(np.asarray(out1), ref_out1, rtol=1e-5, atol=1e-3)
    np.testing.assert_allclose(float(t1), ref_t1, rtol=1e-5, atol=1e-6)
    assert none_val is None

    # --- case 2: two-pass path with row AND column remainders (masked body) -
    B2, C2 = 20, 320
    logits2 = jax.random.normal(k3, (B2, C2), dtype=jnp.float32) * 0.7
    labels2 = jax.random.randint(k4, (B2,), 0, C2, dtype=jnp.int32)
    labels2 = labels2.at[0].set(-1).at[7].set(-1).at[19].set(-1)
    t_prev = jnp.asarray(0.05, dtype=jnp.float32)

    out2, _, t2 = curricular_face(logits2, labels2, t_prev,
                                  tile_b=8, tile_c=128, fused=False)
    out2 = jax.block_until_ready(out2)
    ref_out2, ref_t2 = _reference(np.asarray(logits2), np.asarray(labels2), 0.05)
    np.testing.assert_allclose(np.asarray(out2), ref_out2, rtol=1e-5, atol=1e-3)
    np.testing.assert_allclose(float(t2), ref_t2, rtol=1e-5, atol=1e-6)

    # --- case 3: two-pass path, auto tiles, no remainders (mask-free body,
    #             nb=2 for megacore balance) -------------------------------
    B3, C3 = 32, 512
    logits3 = jax.random.normal(k5, (B3, C3), dtype=jnp.float32) * 0.7
    labels3 = jax.random.randint(k6, (B3,), 0, C3, dtype=jnp.int32)
    labels3 = labels3.at[3].set(-1).at[30].set(-1)
    t_prev3 = jnp.asarray(0.1, dtype=jnp.float32)

    out3, _, t3 = curricular_face(logits3, labels3, t_prev3, fused=False)
    out3 = jax.block_until_ready(out3)
    ref_out3, ref_t3 = _reference(np.asarray(logits3), np.asarray(labels3), 0.1)
    np.testing.assert_allclose(np.asarray(out3), ref_out3, rtol=1e-5, atol=1e-3)
    np.testing.assert_allclose(float(t3), ref_t3, rtol=1e-5, atol=1e-6)

    print("KERNEL_OK")
</pallas_src>

<mosaic_0001>
module attributes {stable_mosaic.version = 11 : i64} {
  func.func @_fused_kernel(%arg0: memref<1x1xf32, #tpu.memory_space<smem>>, %arg1: memref<16x256xf32, #tpu.memory_space<vmem>>, %arg2: memref<16x1xi32, #tpu.memory_space<vmem>>, %arg3: memref<16x256xf32, #tpu.memory_space<vmem>>, %arg4: memref<1x1xf32, #tpu.memory_space<vmem>>) attributes {dimension_semantics = [], scalar_prefetch = 0 : i64, scratch_operands = 0 : i64, tpu.core_type = #tpu.core_type<tc>} {
    %c0 = arith.constant 0 : index
    %c0_0 = arith.constant 0 : index
    %0 = vector.load %arg1[%c0, %c0_0] : memref<16x256xf32, #tpu.memory_space<vmem>>, vector<16x256xf32>
    %cst = arith.constant -1.000000e+00 : f32
    %cst_1 = arith.constant 1.000000e+00 : f32
    %1 = vector.broadcast %cst : f32 to vector<16x256xf32>
    %2 = arith.maximumf %1, %0 : vector<16x256xf32>
    %3 = vector.broadcast %cst_1 : f32 to vector<16x256xf32>
    %4 = arith.minimumf %3, %2 : vector<16x256xf32>
    %c0_2 = arith.constant 0 : index
    %c0_3 = arith.constant 0 : index
    %5 = vector.load %arg2[%c0_2, %c0_3] : memref<16x1xi32, #tpu.memory_space<vmem>>, vector<16x1xi32>
    %c-1_i32 = arith.constant -1 : i32
    %6 = vector.broadcast %c-1_i32 : i32 to vector<16x1xi32>
    %7 = arith.cmpi ne, %5, %6 : vector<16x1xi32>
    %8 = tpu.iota {dimensions = array<i32: 1>} : vector<16x256xi32>
    %9 = vector.broadcast %5 : vector<16x1xi32> to vector<16x256xi32>
    %10 = arith.cmpi eq, %8, %9 : vector<16x256xi32>
    %cst_4 = arith.constant dense<0.000000e+00> : vector<16xf32>
    %11 = vector.multi_reduction <add>, %4, %cst_4 [1] : vector<16x256xf32> to vector<16xf32>
    %12 = vector.shape_cast %11 : vector<16xf32> to vector<16x1xf32>
    %cst_5 = arith.constant 0.000000e+00 : f32
    %13 = vector.broadcast %cst_5 : f32 to vector<16x1xf32>
    %14 = arith.select %7, %12, %13 : vector<16x1xi1>, vector<16x1xf32>
    %cst_6 = arith.constant 0.000000e+00 : f32
    %15 = vector.broadcast %cst_6 : f32 to vector<16x256xf32>
    %16 = arith.select %10, %4, %15 : vector<16x256xi1>, vector<16x256xf32>
    %cst_7 = arith.constant dense<0.000000e+00> : vector<16xf32>
    %17 = vector.multi_reduction <add>, %16, %cst_7 [1] : vector<16x256xf32> to vector<16xf32>
    %18 = vector.shape_cast %17 : vector<16xf32> to vector<16x1xf32>
    %19 = arith.extui %7 : vector<16x1xi1> to vector<16x1xi32>
    %20 = arith.sitofp %19 : vector<16x1xi32> to vector<16x1xf32>
    %cst_8 = arith.constant dense<0.000000e+00> : vector<1xf32>
    %21 = vector.multi_reduction <add>, %20, %cst_8 [0] : vector<16x1xf32> to vector<1xf32>
    %22 = vector.shape_cast %21 : vector<1xf32> to vector<1x1xf32>
    %cst_9 = arith.constant dense<0.000000e+00> : vector<1xf32>
    %23 = vector.multi_reduction <add>, %14, %cst_9 [0] : vector<16x1xf32> to vector<1xf32>
    %24 = vector.shape_cast %23 : vector<1xf32> to vector<1x1xf32>
    %cst_10 = arith.constant 1.000000e+00 : f32
    %25 = vector.broadcast %cst_10 : f32 to vector<1x1xf32>
    %26 = arith.maximumf %22, %25 : vector<1x1xf32>
    %cst_11 = arith.constant 2.560000e+02 : f32
    %27 = vector.broadcast %cst_11 : f32 to vector<1x1xf32>
    %28 = arith.mulf %26, %27 : vector<1x1xf32>
    %29 = arith.divf %24, %28 : vector<1x1xf32>
    %cst_12 = arith.constant 0.00999999977 : f32
    %30 = vector.broadcast %cst_12 : f32 to vector<1x1xf32>
    %31 = arith.mulf %29, %30 : vector<1x1xf32>
    %c0_13 = arith.constant 0 : index
    %c0_14 = arith.constant 0 : index
    %32 = memref.load %arg0[%c0_13, %c0_14] : memref<1x1xf32, #tpu.memory_space<smem>>
    %cst_15 = arith.constant 9.900000e-01 : f32
    %33 = arith.mulf %cst_15, %32 : f32
    %34 = vector.broadcast %33 : f32 to vector<1x1xf32>
    %35 = arith.addf %31, %34 : vector<1x1xf32>
    %c0_16 = arith.constant 0 : index
    %c0_17 = arith.constant 0 : index
    %36 = vector.load %arg4[%c0_16, %c0_17] : memref<1x1xf32, #tpu.memory_space<vmem>>, vector<1x1xf32>
    tpu.vector_store %arg4[%c0_16, %c0_17], %35 {strides = array<i32>} : memref<1x1xf32, #tpu.memory_space<vmem>>, vector<1x1xf32>,
    %37 = arith.mulf %18, %18 : vector<16x1xf32>
    %cst_18 = arith.constant 1.000000e+00 : f32
    %38 = vector.broadcast %cst_18 : f32 to vector<16x1xf32>
    %39 = arith.subf %38, %37 : vector<16x1xf32>
    %cst_19 = arith.constant 0.000000e+00 : f32
    %40 = vector.broadcast %cst_19 : f32 to vector<16x1xf32>
    %41 = arith.maximumf %39, %40 : vector<16x1xf32>
    %42 = math.sqrt %41 : vector<16x1xf32>
    %cst_20 = arith.constant 0.87758255 : f32
    %43 = vector.broadcast %cst_20 : f32 to vector<16x1xf32>
    %44 = arith.mulf %18, %43 : vector<16x1xf32>
    %cst_21 = arith.constant 0.47942555 : f32
    %45 = vector.broadcast %cst_21 : f32 to vector<16x1xf32>
    %46 = arith.mulf %42, %45 : vector<16x1xf32>
    %47 = arith.subf %44, %46 : vector<16x1xf32>
    %cst_22 = arith.constant -0.87758255 : f32
    %48 = vector.broadcast %cst_22 : f32 to vector<16x1xf32>
    %49 = arith.cmpf ogt, %18, %48 : vector<16x1xf32>
    %cst_23 = arith.constant 0.239712775 : f32
    %50 = vector.broadcast %cst_23 : f32 to vector<16x1xf32>
    %51 = arith.subf %18, %50 : vector<16x1xf32>
    %52 = arith.select %49, %47, %51 : vector<16x1xi1>, vector<16x1xf32>
    %cst_24 = arith.constant 0x7F800000 : f32
    %53 = vector.broadcast %cst_24 : f32 to vector<16x1xf32>
    %54 = arith.select %7, %47, %53 : vector<16x1xi1>, vector<16x1xf32>
    %55 = vector.broadcast %54 : vector<16x1xf32> to vector<16x256xf32>
    %56 = arith.cmpf ogt, %4, %55 : vector<16x256xf32>
    %57 = vector.broadcast %35 : vector<1x1xf32> to vector<16x256xf32>
    %58 = arith.addf %57, %4 : vector<16x256xf32>
    %59 = arith.mulf %4, %58 : vector<16x256xf32>
    %60 = arith.select %56, %59, %4 : vector<16x256xi1>, vector<16x256xf32>
    %61 = vector.shape_cast %52 : vector<16x1xf32> to vector<16x1xf32>
    %62 = vector.broadcast %61 : vector<16x1xf32> to vector<16x256xf32>
    %63 = arith.select %10, %62, %60 : vector<16x256xi1>, vector<16x256xf32>
    %cst_25 = arith.constant 6.400000e+01 : f32
    %64 = vector.broadcast %cst_25 : f32 to vector<16x256xf32>
    %65 = arith.mulf %63, %64 : vector<16x256xf32>
    %c0_26 = arith.constant 0 : index
    %c0_27 = arith.constant 0 : index
    %66 = vector.load %arg3[%c0_26, %c0_27] : memref<16x256xf32, #tpu.memory_space<vmem>>, vector<16x256xf32>
    tpu.vector_store %arg3[%c0_26, %c0_27], %65 {strides = array<i32>} : memref<16x256xf32, #tpu.memory_space<vmem>>, vector<16x256xf32>,
    return
  }
}

</mosaic_0001>

<llo_original>
// kernel: _curricular_face.1
$region0: #{_curricular_face.1}
  #allocation0 [shape = 'u32[]', space=smem, size = 0x4, offset = 0x4, fixed_abs, tag = 'smem constant byte address 0x4 - core index']
  #allocation1 [shape = 'u32[144,128]{1,0:T(1,128)}', space=vmem, size = 0x12000, scoped, tag = 'internal scratch']
  #allocation2 [shape = 'f32[1,1]{1,0:T(1,128)S(6)}', space=smem, size = 0x200, scoped, tag = 'scoped memory for _curricular_face.1']
  %s0 = inlined_call_operand.<no memory space> [shape: f32[1,1], index: 0, kind: input, shape index: {}]
  %s1 = inlined_call_operand.hbm [shape: f32[16,256], index: 1, kind: input, shape index: {}]
  %s2 = inlined_call_operand.vmem [shape: s32[16,1], index: 2, kind: input, shape index: {}]
  %s3 = inlined_call_operand.hbm [shape: f32[16,256], index: 3, kind: output, shape index: {0}]
  %s4 = inlined_call_operand.hbm [shape: f32[1,1], index: 4, kind: output, shape index: {1}]
  %5 = xla_tuple %s3, %s4
  %s6 = sld [smem:[#allocation0]]
  $region34: #{_curricular_face.1} parent=0
    _
  %s8 = ssub.s32 1, %s6
  %s9 = scalar_select 0, %s8, %s6
  %10 = sst [smem:[#allocation2]] %s0
  $region1: #{_curricular_face.1} parent=0
    #allocation3 [shape = 'u8[16384]{0}', space=vmem, size = 0x4000, scoped, tag = 'input window, operand 1, single buffered']
    #allocation4 [shape = 's32[1]{0}', space=sflag, size = 0x4, scoped, tag = 'scoped memory for _curricular_face.1']
    #allocation5 [shape = 's32[1]{0}', space=sflag, size = 0x4, scoped, tag = 'scoped memory for _curricular_face.1']
    #allocation6 [shape = 'u8[16384]{0}', space=vmem, size = 0x4000, scoped, tag = 'output window, operand 0, single buffered']
    #allocation7 [shape = 'u8[512]{0}', space=vmem, size = 0x400, scoped, tag = 'output window, operand 1, single buffered']
    #allocation8 [shape = 's32[1]{0}', space=sflag, size = 0x4, scoped, tag = 'scoped memory for _curricular_face.1']
    %11 = vsyncpa [#allocation4], 0
    %12 = vsyncpa [#allocation5], 0
    %13 = vsyncpa [#allocation8], 0
    // Predicated region
    $region2: #{_curricular_face.1} parent=1 // pred_check
      _
    $region3: #{_curricular_face.1} parent=1 // pred_check_branch
      %15 = sbr.rel (0) target = $region5
    $region4: #{_curricular_face.1} parent=1 // pred_region
      _
    $region5: #{_curricular_face.1} parent=1 // pred_fallthru
      _
    // Predicated region
    $region6: #{_curricular_face.1} parent=1 // pred_check
      _
    $region7: #{_curricular_face.1} parent=1 // pred_check_branch
      %17 = sbr.rel (0) target = $region9
    $region8: #{_curricular_face.1} parent=1 // pred_region
      %s19 = ssub.s32 512, 512
      %20 = vsyncadd [#allocation4], %s19
      %s21 = sshll.u32 [#allocation3], 4
      %s22 = int_to_ptr.vmem [resolvable:$true] %s21
      %27 = dma.hbm_to_vmem [thread:$0]  %s1, 512, %s22, [#allocation4], 256, 256, 16
    $region9: #{_curricular_face.1} parent=1 // pred_fallthru
      _
    // Predicated region
    $region10: #{_curricular_face.1} parent=1 // pred_check
      _
    $region11: #{_curricular_face.1} parent=1 // pred_check_branch
      %29 = sbr.rel (0) target = $region13
    $region12: #{_curricular_face.1} parent=1 // pred_region
      _
    $region13: #{_curricular_face.1} parent=1 // pred_fallthru
      _
    // Predicated region
    $region14: #{_curricular_face.1} parent=1 // pred_check
      _
    $region15: #{_curricular_face.1} parent=1 // pred_check_branch
      %31 = sbr.rel (0) target = $region17
    $region16: #{_curricular_face.1} parent=1 // pred_region
      %32 = dma.done [#allocation4], 512
    $region17: #{_curricular_face.1} parent=1 // pred_fallthru
      _
    %v33 = vld [vmem:[#allocation3] sm:$0xff]
    %v34 = vld [vmem:[#allocation3 + $0x8] sm:$0xff]
    %v35 = vld [vmem:[#allocation3 + $0x10] sm:$0xff]
    %v36 = vld [vmem:[#allocation3 + $0x18] sm:$0xff]
    %v37 = vmax.f32 %v33, -1.0
    %v38 = vmax.f32 %v34, -1.0
    %v39 = vmax.f32 %v35, -1.0
    %v40 = vmax.f32 %v36, -1.0
    %v41 = vmin.f32 %v37, 1.0
    %v42 = vmin.f32 %v38, 1.0
    %v43 = vmin.f32 %v39, 1.0
    %v44 = vmin.f32 %v40, 1.0
    %v45 = vld [vmem:[%s2] sm:$0xff]
    %v46 = vld [vmem:[%s2 + $0x8] sm:$0xff]
    %vm47 = vcmp.ne.s32.totalorder %v45, 4294967295
    %vm48 = vcmp.ne.s32.totalorder %v46, 4294967295
    %v49 = vlaneseq
    %v50 = vand.u32 %v49, 127
    %v51 = vadd.s32 %v50, 128
    %52 = vset.pattern.permute.xlu0 0
    %53 = vperm.xlu0 %52, %v45
    %v54 = vpop.permute.xlu0 %53
    %55 = vset.pattern.permute.xlu0 0
    %56 = vperm.xlu0 %55, %v46
    %v57 = vpop.permute.xlu0 %56
    %vm58 = vcmp.eq.s32.totalorder %v50, %v54
    %vm59 = vcmp.eq.s32.totalorder %v51, %v54
    %vm60 = vcmp.eq.s32.totalorder %v50, %v57
    %vm61 = vcmp.eq.s32.totalorder %v51, %v57
    %v62 = vadd.f32 %v41, %v42
    %63 = vadd.xlane.f32.xlu0 %v62
    %v64 = vpop.xlane.xlu0 %63
    %v65 = vadd.f32 %v43, %v44
    %66 = vadd.xlane.f32.xlu0 %v65
    %v67 = vpop.xlane.xlu0 %66
    %v68 = vsel %vm47, %v64, 0.0
    %v69 = vsel %vm48, %v67, 0.0
    %v70 = vsel %vm58, %v41, 0.0
    %v71 = vsel %vm59, %v42, 0.0
    %v72 = vsel %vm60, %v43, 0.0
    %v73 = vsel %vm61, %v44, 0.0
    %v74 = vadd.f32 %v70, %v71
    %75 = vadd.xlane.f32.xlu0 %v74
    %v76 = vpop.xlane.xlu0 %75
    %v77 = vadd.f32 %v72, %v73
    %78 = vadd.xlane.f32.xlu0 %v77
    %v79 = vpop.xlane.xlu0 %78
    %v80 = vsel %vm47, 1, 0
    %v81 = vsel %vm48, 1, 0
    %v82 = vcvt.s32.f32 %v80
    %v83 = vcvt.s32.f32 %v81
    %vm84 = vcmask 7168
    %v85 = vsel %vm84, %v82, 0.0
    %v86 = vsel %vm84, %v83, 0.0
    %v87 = vadd.f32 %v85, %v86
    %v88 = vrot.slane %v87, 4
    %v89 = vadd.f32 %v87, %v88
    %v90 = vrot.slane %v89, 2
    %v91 = vadd.f32 %v89, %v90
    %v92 = vrot.slane %v91, 1
    %v93 = vadd.f32 %v91, %v92
    %v94 = vsel %vm84, %v68, 0.0
    %v95 = vsel %vm84, %v69, 0.0
    %v96 = vadd.f32 %v94, %v95
    %v97 = vrot.slane %v96, 4
    %v98 = vadd.f32 %v96, %v97
    %v99 = vrot.slane %v98, 2
    %v100 = vadd.f32 %v98, %v99
    %v101 = vrot.slane %v100, 1
    %v102 = vadd.f32 %v100, %v101
    %v103 = vmax.f32 %v93, 1.0
    %v104 = vmul.f32 %v103, 256.0
    %v105 = vrcp.pop %v104
    %v106 = vmul.f32 %v102, %v105
    %v107 = vmul.f32 %v106, 0.01
    %s108 = sld [smem:[#allocation2]]
    %s109 = smul.f32 %s108, 0.99
    %v110 = vstv %s109
    %v111 = vadd.f32 %v107, %v110
    %vm112 = vcmask 0
    %113 = vst.msk [vmem:[#allocation7] sm:$0x1] %vm112, %v111
    %v114 = vmul.f32 %v76, %v76
    %v115 = vmul.f32 %v79, %v79
    %v116 = vsub.f32 1.0, %v114
    %v117 = vsub.f32 1.0, %v115
    %v118 = vmax.f32 %v116, 0.0
    %v119 = vmax.f32 %v117, 0.0
    %v120 = vrsqrt.pop %v118
    %v121 = vmul.f32 %v118, %v120
    %vm122 = vcmp.eq.f32.partialorder %v118, inf
    %v123 = vsel %vm122, %v118, %v121
    %vm124 = vcmp.eq.f32.partialorder %v118, 0.0
    %v125 = vand.u32 %v118, 2147483648
    %v126 = vsel %vm124, %v125, %v123
    %v127 = vrsqrt.pop %v119
    %v128 = vmul.f32 %v119, %v127
    %vm129 = vcmp.eq.f32.partialorder %v119, inf
    %v130 = vsel %vm129, %v119, %v128
    %vm131 = vcmp.eq.f32.partialorder %v119, 0.0
    %v132 = vand.u32 %v119, 2147483648
    %v133 = vsel %vm131, %v132, %v130
    %v134 = vmul.f32 %v76, 0.87758255
    %v135 = vmul.f32 %v79, 0.87758255
    %v136 = vmul.f32 %v126, 0.47942555
    %v137 = vmul.f32 %v133, 0.47942555
    %v138 = vsub.f32 %v134, %v136
    %v139 = vsub.f32 %v135, %v137
    %vm140 = vcmp.gt.f32.partialorder %v76, -0.87758255
    %vm141 = vcmp.gt.f32.partialorder %v79, -0.87758255
    %v142 = vsub.f32 %v76, 0.23971277
    %v143 = vsub.f32 %v79, 0.23971277
    %v144 = vsel %vm140, %v138, %v142
    %v145 = vsel %vm141, %v139, %v143
    %v146 = vsel %vm47, %v138, inf
    %v147 = vsel %vm48, %v139, inf
    %149 = vset.pattern.permute.xlu0 0
    %150 = vperm.xlu0 %149, %v146
    %v151 = vpop.permute.xlu0 %150
    %154 = vset.pattern.permute.xlu0 0
    %155 = vperm.xlu0 %154, %v147
    %v156 = vpop.permute.xlu0 %155
    %vm158 = vcmp.gt.f32.partialorder %v41, %v151
    %vm159 = vcmp.gt.f32.partialorder %v42, %v151
    %vm160 = vcmp.gt.f32.partialorder %v43, %v156
    %vm161 = vcmp.gt.f32.partialorder %v44, %v156
    %163 = vset.pattern.permute.xlu0 0
    %164 = vperm.xlu0 %163, %v111
    %v165 = vpop.permute.xlu0 %164
    %v167 = vadd.f32 %v165, %v41
    %v168 = vadd.f32 %v165, %v42
    %v169 = vadd.f32 %v165, %v43
    %v170 = vadd.f32 %v165, %v44
    %v171 = vmul.f32 %v41, %v167
    %v172 = vmul.f32 %v42, %v168
    %v173 = vmul.f32 %v43, %v169
    %v174 = vmul.f32 %v44, %v170
    %v175 = vsel %vm158, %v171, %v41
    %v176 = vsel %vm159, %v172, %v42
    %v177 = vsel %vm160, %v173, %v43
    %v178 = vsel %vm161, %v174, %v44
    %v179 = vsel %vm58, %v144, %v175
    %v180 = vsel %vm59, %v144, %v176
    %v181 = vsel %vm60, %v145, %v177
    %v182 = vsel %vm61, %v145, %v178
    %v183 = vmul.f32 %v179, 64.0
    %v184 = vmul.f32 %v180, 64.0
    %v185 = vmul.f32 %v181, 64.0
    %v186 = vmul.f32 %v182, 64.0
    %187 = vst [vmem:[#allocation6] sm:$0xff] %v183
    %188 = vst [vmem:[#allocation6 + $0x8] sm:$0xff] %v184
    %189 = vst [vmem:[#allocation6 + $0x10] sm:$0xff] %v185
    %190 = vst [vmem:[#allocation6 + $0x18] sm:$0xff] %v186
    // Predicated region
    $region18: #{_curricular_face.1} parent=1 // pred_check
      _
    $region19: #{_curricular_face.1} parent=1 // pred_check_branch
      %192 = sbr.rel (0) target = $region21
    $region20: #{_curricular_face.1} parent=1 // pred_region
      %s194 = ssub.s32 512, 512
      %195 = vsyncadd [#allocation5], %s194
      %s196 = sshll.u32 [#allocation6], 4
      %s197 = int_to_ptr.vmem [resolvable:$true] %s196
      %202 = dma.vmem_to_hbm [thread:$0]  %s197, 512, %s3, [#allocation5], 256, 256, 16
    $region21: #{_curricular_face.1} parent=1 // pred_fallthru
      _
    // Predicated region
    $region22: #{_curricular_face.1} parent=1 // pred_check
      _
    $region23: #{_curricular_face.1} parent=1 // pred_check_branch
      %204 = sbr.rel (0) target = $region25
    $region24: #{_curricular_face.1} parent=1 // pred_region
      %s206 = ssub.s32 16, 16
      %207 = vsyncadd [#allocation8], %s206
      %s209 = sshll.u32 [#allocation7], 4
      %s210 = int_to_ptr.vmem [resolvable:$true] %s209
      %212 = dma.vmem_to_hbm [thread:$0]  %s210, 16, %s4, [#allocation8]
    $region25: #{_curricular_face.1} parent=1 // pred_fallthru
      _
    // Predicated region
    $region26: #{_curricular_face.1} parent=1 // pred_check
      _
    $region27: #{_curricular_face.1} parent=1 // pred_check_branch
      %214 = sbr.rel (0) target = $region29
    $region28: #{_curricular_face.1} parent=1 // pred_region
      %215 = dma.done [#allocation5], 512
    $region29: #{_curricular_face.1} parent=1 // pred_fallthru
      _
    // Predicated region
    $region30: #{_curricular_face.1} parent=1 // pred_check
      _
    $region31: #{_curricular_face.1} parent=1 // pred_check_branch
      %217 = sbr.rel (0) target = $region33
    $region32: #{_curricular_face.1} parent=1 // pred_region
      %218 = dma.done [#allocation8], 16
    $region33: #{_curricular_face.1} parent=1 // pred_fallthru
      _
    %219 = vsyncpa [#allocation4], 1
    %220 = vsyncpa [#allocation5], 1
    %221 = vsyncpa [#allocation8], 1

</llo_original>
